<compile_context>
chip_gen: v7x
topology: tpu7x:2x2x1
jax: 0.10.0
libtpu: 0.0.40
codegen_flags: <defaults>
</compile_context>

<pallas_src>
import functools

import jax
import jax.numpy as jnp
from jax import lax
from jax.experimental import pallas as pl
from jax.experimental.pallas import tpu as pltpu


def _round_up(x, m):
    return (x + m - 1) // m * m


def _dropout_keep_mask(seed_u32, shape, row_off, col_off, p):
    """Stateless keep-mask: keep with prob (1-p), deterministic in (seed, position)."""
    rows = lax.broadcasted_iota(jnp.int32, shape, 0).astype(jnp.uint32) + row_off
    cols = lax.broadcasted_iota(jnp.int32, shape, 1).astype(jnp.uint32) + col_off
    h = rows * jnp.uint32(0x9E3779B1) + cols * jnp.uint32(0x85EBCA77) + seed_u32
    h = h ^ (h >> jnp.uint32(16))
    h = h * jnp.uint32(0x7FEB352D)
    h = h ^ (h >> jnp.uint32(15))
    h = h * jnp.uint32(0x846CA68B)
    h = h ^ (h >> jnp.uint32(16))
    # 24 random bits, signed-compare against p * 2^24 (avoids unsigned-cmp quirks).
    r24 = (h >> jnp.uint32(8)).astype(jnp.int32)
    thresh = jnp.int32(min(int(p * float(1 << 24)), (1 << 24) - 1))
    return r24 >= thresh


def _weight_drop_linear_kernel(seed_ref, x_ref, wt_ref, b_ref, o_ref, acc_ref,
                               *, p, training, tn, tk):
    k = pl.program_id(2)

    @pl.when(k == 0)
    def _zero():
        acc_ref[...] = jnp.zeros_like(acc_ref)

    w = wt_ref[...]                                  # (tk, tn) tile of W^T [IN, OUT]
    if training and p >= 1.0:
        w = jnp.zeros_like(w)
    elif training and p > 0.0:
        j = pl.program_id(1)
        seed_u32 = seed_ref[0].astype(jnp.uint32)
        row_off = (k * tk).astype(jnp.uint32)
        col_off = (j * tn).astype(jnp.uint32)
        keep = _dropout_keep_mask(seed_u32, w.shape, row_off, col_off, p)
        scale = jnp.asarray(1.0 / (1.0 - p), dtype=w.dtype)
        w = jnp.where(keep, w * scale, jnp.zeros_like(w))

    acc_ref[...] += jnp.dot(x_ref[...], w, preferred_element_type=jnp.float32)

    @pl.when(k == pl.num_programs(2) - 1)
    def _store():
        o_ref[...] = (acc_ref[...] + b_ref[...].astype(jnp.float32)).astype(o_ref.dtype)


def weight_drop_linear(x, weight, bias, seed, *, dropout=0.5, training=True,
                       tm=256, tn=512, tk=512):
    """WeightDropV0(nn.Linear(IN, OUT), ['weight'], dropout).forward(x).

    x: [B, IN]  weight: [OUT, IN] (PyTorch layout)  bias: [OUT]  seed: int32[1]
    """
    B, IN = x.shape
    OUT, IN_w = weight.shape
    assert IN == IN_w, (IN, IN_w)

    # Pre-transpose in the wrapper: MXU-friendly RHS layout, lane-dense output.
    w_t = weight.T                                   # [IN, OUT]

    # Clamp tiles to the problem, respecting the (8, 128) layout constraint.
    tm = max(8, min(tm, _round_up(B, 8)))
    tk = max(128, min(tk, _round_up(IN, 128)))
    tn = max(128, min(tn, _round_up(OUT, 128)))

    Bp, INp, OUTp = _round_up(B, tm), _round_up(IN, tk), _round_up(OUT, tn)

    x_p = x if (Bp == B and INp == IN) else jnp.pad(x, ((0, Bp - B), (0, INp - IN)))
    w_p = w_t if (INp == IN and OUTp == OUT) else jnp.pad(
        w_t, ((0, INp - IN), (0, OUTp - OUT)))
    b_p = bias if OUTp == OUT else jnp.pad(bias, (0, OUTp - OUT))
    b2d = b_p.reshape(1, OUTp)

    grid = (Bp // tm, OUTp // tn, INp // tk)

    kernel = functools.partial(
        _weight_drop_linear_kernel,
        p=float(dropout), training=bool(training), tn=tn, tk=tk)

    itemsize = jnp.dtype(x.dtype).itemsize
    cost = pl.CostEstimate(
        flops=2 * Bp * INp * OUTp,
        transcendentals=0,
        bytes_accessed=(Bp * INp + INp * OUTp + Bp * OUTp) * itemsize,
    )

    out = pl.pallas_call(
        kernel,
        out_shape=jax.ShapeDtypeStruct((Bp, OUTp), x.dtype),
        grid=grid,
        in_specs=[
            pl.BlockSpec(memory_space=pltpu.MemorySpace.SMEM),        # seed scalar
            pl.BlockSpec((tm, tk), lambda i, j, k: (i, k)),           # x tile
            pl.BlockSpec((tk, tn), lambda i, j, k: (k, j)),           # W^T tile
            pl.BlockSpec((1, tn), lambda i, j, k: (0, j)),            # bias tile
        ],
        out_specs=pl.BlockSpec((tm, tn), lambda i, j, k: (i, j)),
        scratch_shapes=[pltpu.VMEM((tm, tn), jnp.float32)],
        compiler_params=pltpu.CompilerParams(
            dimension_semantics=("parallel", "parallel", "arbitrary")),
        cost_estimate=cost,
    )(seed, x_p, w_p, b2d)

    return out[:B, :OUT]


# TODO(synk): the RNNBase path of WeightDropV0 (flatten_parameters monkeypatch + weight_hh
# dropout inside a recurrent cell) and the variational (row-mask) mode are not reproduced;
# only the Linear-wrapping, variational=False usage is implemented.

if __name__ == "__main__":
    key = jax.random.PRNGKey(0)
    k_x, k_w, k_b, k_x2, k_w2, k_b2 = jax.random.split(key, 6)

    # Aligned shapes: exercise a real 3-D grid (2 x 2 x 2) with small tiles.
    B, IN, OUT = 16, 256, 256
    dropout_p = 0.5

    x = jax.random.normal(k_x, (B, IN), dtype=jnp.float32)
    weight_raw = jax.random.normal(k_w, (OUT, IN), dtype=jnp.float32) * 0.1
    bias = jax.random.normal(k_b, (OUT,), dtype=jnp.float32) * 0.1
    seed = jnp.array([42], dtype=jnp.int32)

    # --- eval mode: dropout is a no-op, must match plain linear ---
    y_eval = weight_drop_linear(x, weight_raw, bias, seed,
                                dropout=dropout_p, training=False,
                                tm=8, tn=128, tk=128)
    y_ref = x @ weight_raw.T + bias[None, :]
    assert jnp.allclose(y_eval, y_ref, atol=1e-4, rtol=1e-4)

    # --- training mode: exact match against a host-side replica of the mask ---
    y_train = weight_drop_linear(x, weight_raw, bias, seed,
                                 dropout=dropout_p, training=True,
                                 tm=8, tn=128, tk=128)
    keep_host = _dropout_keep_mask(jnp.uint32(42), (IN, OUT),
                                   jnp.uint32(0), jnp.uint32(0), dropout_p)
    w_dropped = jnp.where(keep_host, weight_raw.T / (1.0 - dropout_p), 0.0)
    y_train_ref = x @ w_dropped + bias[None, :]
    assert jnp.allclose(y_train, y_train_ref, atol=1e-4, rtol=1e-4)
    keep_rate = jnp.mean(keep_host.astype(jnp.float32))
    assert 0.4 < float(keep_rate) < 0.6          # ~1 - p survivors

    # --- ragged shapes: padding + slicing path (eval mode exact check) ---
    B2, IN2, OUT2 = 5, 70, 40
    x2 = jax.random.normal(k_x2, (B2, IN2), dtype=jnp.float32)
    w2 = jax.random.normal(k_w2, (OUT2, IN2), dtype=jnp.float32) * 0.1
    b2 = jax.random.normal(k_b2, (OUT2,), dtype=jnp.float32) * 0.1
    y2 = weight_drop_linear(x2, w2, b2, seed, dropout=dropout_p, training=False)
    assert jnp.allclose(y2, x2 @ w2.T + b2[None, :], atol=1e-4, rtol=1e-4)

    jax.block_until_ready((y_eval, y_train, y2))
    print("KERNEL_OK")
</pallas_src>

<mosaic_0001>
module attributes {stable_mosaic.version = 11 : i64} {
  func.func @_weight_drop_linear_kernel(%arg0: i32, %arg1: i32, %arg2: i32, %arg3: memref<1xi32, #tpu.memory_space<smem>>, %arg4: memref<8x128xf32, #tpu.memory_space<vmem>>, %arg5: memref<128x128xf32, #tpu.memory_space<vmem>>, %arg6: memref<1x128xf32, #tpu.memory_space<vmem>>, %arg7: memref<8x128xf32, #tpu.memory_space<vmem>>, %arg8: memref<8x128xf32, #tpu.memory_space<vmem>>) attributes {dimension_semantics = [#tpu.dimension_semantics<parallel>, #tpu.dimension_semantics<parallel>, #tpu.dimension_semantics<arbitrary>], iteration_bounds = array<i64: 2, 2, 2>, scalar_prefetch = 0 : i64, scratch_operands = 1 : i64, tpu.core_type = #tpu.core_type<tc>, window_params = [{transform_indices = @transform_0, window_bounds = array<i64: 1>}, {transform_indices = @transform_1, window_bounds = array<i64: 8, 128>}, {transform_indices = @transform_2, window_bounds = array<i64: 128, 128>}, {transform_indices = @transform_3, window_bounds = array<i64: 1, 128>}, {transform_indices = @transform_4, window_bounds = array<i64: 8, 128>}]} {
    %c0_i32 = arith.constant 0 : i32
    %0 = arith.cmpi eq, %arg2, %c0_i32 : i32
    %1 = arith.extui %0 : i1 to i32
    %c0_i32_0 = arith.constant 0 : i32
    %2 = arith.cmpi ne, %1, %c0_i32_0 : i32
    scf.if %2 {
      %cst_9 = arith.constant 0.000000e+00 : f32
      %12 = vector.broadcast %cst_9 : f32 to vector<8x128xf32>
      %c0_10 = arith.constant 0 : index
      %c0_11 = arith.constant 0 : index
      %13 = vector.load %arg8[%c0_10, %c0_11] : memref<8x128xf32, #tpu.memory_space<vmem>>, vector<8x128xf32>
      tpu.vector_store %arg8[%c0_10, %c0_11], %12 {strides = array<i32>} : memref<8x128xf32, #tpu.memory_space<vmem>>, vector<8x128xf32>,
    } else {
    }
    %c0 = arith.constant 0 : index
    %c0_1 = arith.constant 0 : index
    %3 = vector.load %arg5[%c0, %c0_1] : memref<128x128xf32, #tpu.memory_space<vmem>>, vector<128x128xf32>
    %c0_2 = arith.constant 0 : index
    %c0_3 = arith.constant 0 : index
    %4 = vector.load %arg8[%c0_2, %c0_3] : memref<8x128xf32, #tpu.memory_space<vmem>>, vector<8x128xf32>
    %c0_4 = arith.constant 0 : index
    %c0_5 = arith.constant 0 : index
    %5 = vector.load %arg4[%c0_4, %c0_5] : memref<8x128xf32, #tpu.memory_space<vmem>>, vector<8x128xf32>
    %cst = arith.constant dense<0.000000e+00> : vector<8x128xf32>
    %6 = tpu.matmul %5, %3, %cst {dimension_numbers = #tpu.dot_dimension_numbers<[1], [0], [0], [1], [0, 0, 1, 1], [], []>} : vector<8x128xf32>, vector<128x128xf32>, vector<8x128xf32> -> vector<8x128xf32>
    %7 = arith.addf %4, %6 : vector<8x128xf32>
    %c0_6 = arith.constant 0 : index
    %c0_7 = arith.constant 0 : index
    %8 = vector.load %arg8[%c0_6, %c0_7] : memref<8x128xf32, #tpu.memory_space<vmem>>, vector<8x128xf32>
    tpu.vector_store %arg8[%c0_6, %c0_7], %7 {strides = array<i32>} : memref<8x128xf32, #tpu.memory_space<vmem>>, vector<8x128xf32>,
    %c1_i32 = arith.constant 1 : i32
    %9 = arith.cmpi eq, %arg2, %c1_i32 : i32
    %10 = arith.extui %9 : i1 to i32
    %c0_i32_8 = arith.constant 0 : i32
    %11 = arith.cmpi ne, %10, %c0_i32_8 : i32
    scf.if %11 {
      %c0_9 = arith.constant 0 : index
      %c0_10 = arith.constant 0 : index
      %12 = vector.load %arg8[%c0_9, %c0_10] : memref<8x128xf32, #tpu.memory_space<vmem>>, vector<8x128xf32>
      %c0_11 = arith.constant 0 : index
      %c0_12 = arith.constant 0 : index
      %13 = vector.load %arg6[%c0_11, %c0_12] : memref<1x128xf32, #tpu.memory_space<vmem>>, vector<1x128xf32>
      %14 = vector.broadcast %13 : vector<1x128xf32> to vector<8x128xf32>
      %15 = arith.addf %12, %14 : vector<8x128xf32>
      %c0_13 = arith.constant 0 : index
      %c0_14 = arith.constant 0 : index
      %16 = vector.load %arg7[%c0_13, %c0_14] : memref<8x128xf32, #tpu.memory_space<vmem>>, vector<8x128xf32>
      tpu.vector_store %arg7[%c0_13, %c0_14], %15 {strides = array<i32>} : memref<8x128xf32, #tpu.memory_space<vmem>>, vector<8x128xf32>,
    } else {
    }
    return
  }
  func.func @transform_0(%arg0: i32, %arg1: i32, %arg2: i32) -> i32 {
    %c0_i32 = arith.constant 0 : i32
    %c0_i32_0 = arith.constant 0 : i32
    return %c0_i32 : i32
  }
  func.func @transform_1(%arg0: i32, %arg1: i32, %arg2: i32) -> (i32, i32) {
    %c0_i32 = arith.constant 0 : i32
    return %arg0, %arg2 : i32, i32
  }
  func.func @transform_2(%arg0: i32, %arg1: i32, %arg2: i32) -> (i32, i32) {
    %c0_i32 = arith.constant 0 : i32
    return %arg2, %arg1 : i32, i32
  }
  func.func @transform_3(%arg0: i32, %arg1: i32, %arg2: i32) -> (i32, i32) {
    %c0_i32 = arith.constant 0 : i32
    %c0_i32_0 = arith.constant 0 : i32
    return %c0_i32, %arg1 : i32, i32
  }
  func.func @transform_4(%arg0: i32, %arg1: i32, %arg2: i32) -> (i32, i32) {
    %c0_i32 = arith.constant 0 : i32
    return %arg0, %arg1 : i32, i32
  }
}

</mosaic_0001>

<llo_original>
// kernel: tpu_custom_call.1
$region0: #{tpu_custom_call.1}
  #allocation0 [shape = 'u32[]', space=smem, size = 0x4, offset = 0x4, fixed_abs, tag = 'smem constant byte address 0x4 - core index']
  #allocation1 [shape = 'u32[144,128]{1,0:T(1,128)}', space=vmem, size = 0x12000, scoped, tag = 'internal scratch']
  #allocation2 [shape = 'f32[8,128]{1,0:T(8,128)}', space=vmem, size = 0x1000, scoped, tag = 'scratch operand']
  #allocation3 [shape = 's32[1]{0:T(128)S(6)}', space=smem, size = 0x200, scoped, tag = 'scoped memory for tpu_custom_call.1']
  %s0 = inlined_call_operand.<no memory space> [shape: s32[1], index: 0, kind: input, shape index: {}]
  %s1 = inlined_call_operand.hbm [shape: f32[16,256], index: 1, kind: input, shape index: {}]
  %s2 = inlined_call_operand.hbm [shape: f32[256,256], index: 2, kind: input, shape index: {}]
  %s3 = inlined_call_operand.vmem [shape: f32[1,256], index: 3, kind: input, shape index: {}]
  %s4 = inlined_call_operand.hbm [shape: f32[16,256], index: 4, kind: output, shape index: {}]
  %s5 = sld [smem:[#allocation0]]
  $region65: #{tpu_custom_call.1} parent=0
    _
  %s7 = ssub.s32 1, %s5
  %s8 = scalar_select 0, %s7, %s5
  %9 = sst [smem:[#allocation3]] %s0
  $region1: #{tpu_custom_call.1} parent=0
    #allocation4 [shape = 'u8[8192]{0}', space=vmem, size = 0x2000, scoped, tag = 'input window, operand 1']
    #allocation5 [shape = 's32[2]{0}', space=sflag, size = 0x8, scoped, tag = 'scoped memory for tpu_custom_call.1']
    #allocation6 [shape = 's32[2]{0}', space=sflag, size = 0x8, scoped, tag = 'scoped memory for tpu_custom_call.1']
    #allocation7 [shape = 'u8[131072]{0}', space=vmem, size = 0x20000, scoped, tag = 'input window, operand 2']
    #allocation8 [shape = 's32[2]{0}', space=sflag, size = 0x8, scoped, tag = 'scoped memory for tpu_custom_call.1']
    #allocation9 [shape = 'u8[8192]{0}', space=vmem, size = 0x2000, scoped, tag = 'output window, operand 0']
    %10 = vsyncpa [#allocation5], 0
    %s11 = scalar_lea.sflag [#allocation5], 1
    %12 = vsyncpa %s11, 0
    %13 = vsyncpa [#allocation8], 0
    %s14 = scalar_lea.sflag [#allocation8], 1
    %15 = vsyncpa %s14, 0
    %16 = vsyncpa [#allocation6], 0
    %s17 = scalar_lea.sflag [#allocation6], 1
    %18 = vsyncpa %s17, 0
    loop: start=0, step=1, limit=10
    $region2: #{tpu_custom_call.1} parent=1 // loop_pre_header
      _
    $region3: #{tpu_custom_call.1} parent=1 // loop_header
      %s20 = sphi 0, %s24
      %p21 = scmp.ge.s32.totalorder %s20, 10
      %s27 = sphi 0, %s46
      %s28 = sphi 0, %s42
      %s29 = sphi 0, %s38
      %s30 = sphi 0, %s27
      %s31 = sphi 0, %s28
      %s32 = sphi 0, %s29
      %s33 = sphi 0, %s30
      %s34 = sphi 0, %s31
      %s35 = sphi 0, %s32
      %s47 = sphi 0, %s47
      %s49 = sphi 0, %s47
      %s50 = sphi 0, %s49
      %s64 = sphi 0, %s50
      %s72 = sphi 0, %s74
      %s75 = sphi 0, %s72
      %s76 = sphi 0, %s75
      %s92 = sphi 0, %s76
      %s100 = sphi 0, %s102
      %s103 = sphi 0, %s100
      %s104 = sphi 0, %s103
      %s120 = sphi 0, %s104
      %s126 = sphi 0, %s128
      %s129 = sphi 0, %s126
      %s130 = sphi 0, %s129
      %s146 = sphi 0, %s130
      %s154 = sphi 0, %s156
      %s157 = sphi 0, %s154
      %s158 = sphi 0, %s157
      %s174 = sphi 0, %s158
    $region4: #{tpu_custom_call.1} parent=1 // loop_header_branch
      %23 = sbr.rel (%p21) target = $region8
    $region5: #{tpu_custom_call.1} parent=1 // loop_body
      %s25 = ssub.s32 %s20, 1
      %s26 = ssub.s32 %s20, 2
      %s36 = sadd.s32 1, %s29
      %p37 = scmp.ge.s32.totalorder %s36, 2
      %s38 = scalar_select %p37, 0, %s36
      %s39 = sadd.s32 1, %s28
      %s40 = scalar_select %p37, %s39, %s28
      %p41 = scmp.ge.s32.totalorder %s40, 2
      %s42 = scalar_select %p41, 0, %s40
      %s43 = sadd.s32 1, %s27
      %s44 = scalar_select %p41, %s43, %s27
      %p45 = scmp.ge.s32.totalorder %s44, 2
      %s46 = scalar_select %p45, 0, %s44
      %s48 = sadd.s32 %s47, 1
      %p51 = scmp.eq.s32.totalorder %s20, 7
      %p52 = scmp.ne.s32.totalorder %s47, %s49
      %p53 = scmp.eq.s32.totalorder %s20, 0
      %p54 = por %p52, %p53
      %p55 = scmp.ne.s32.totalorder %s47, %s49
      %p56 = scmp.eq.s32.totalorder %s25, 7
      %p57 = por %p55, %p56
      %p58 = scmp.ne.s32.totalorder %s49, %s50
      %p59 = scmp.eq.s32.totalorder %s25, 0
      %p60 = por %p58, %p59
      %p61 = scmp.ne.s32.totalorder %s49, %s50
      %p62 = scmp.eq.s32.totalorder %s26, 7
      %p63 = por %p61, %p62
      %p65 = scmp.ne.s32.totalorder %s50, %s64
      %p66 = scmp.eq.s32.totalorder %s26, 0
      %p67 = por %p65, %p66
      %s68 = ssub.s32 %s27, %s46
      %s69 = ssub.s32 %s29, %s38
      %s70 = sor.u32 %s68, %s69
      %p71 = scmp.eq.s32.totalorder %s70, 0
      %s73 = sadd.s32 %s72, 1
      %s74 = scalar_select %p71, %s72, %s73
      %p77 = pneg %p71
      %p78 = scmp.eq.s32.totalorder %s20, 7
      %p79 = por %p77, %p78
      %p80 = scmp.ne.s32.totalorder %s72, %s75
      %p81 = scmp.eq.s32.totalorder %s20, 0
      %p82 = por %p80, %p81
      %p83 = scmp.ne.s32.totalorder %s72, %s75
      %p84 = scmp.eq.s32.totalorder %s25, 7
      %p85 = por %p83, %p84
      %p86 = scmp.ne.s32.totalorder %s75, %s76
      %p87 = scmp.eq.s32.totalorder %s25, 0
      %p88 = por %p86, %p87
      %p89 = scmp.ne.s32.totalorder %s75, %s76
      %p90 = scmp.eq.s32.totalorder %s26, 7
      %p91 = por %p89, %p90
      %p93 = scmp.ne.s32.totalorder %s76, %s92
      %p94 = scmp.eq.s32.totalorder %s26, 0
      %p95 = por %p93, %p94
      %s96 = ssub.s32 %s29, %s38
      %s97 = ssub.s32 %s28, %s42
      %s98 = sor.u32 %s96, %s97
      %p99 = scmp.eq.s32.totalorder %s98, 0
      %s101 = sadd.s32 %s100, 1
      %s102 = scalar_select %p99, %s100, %s101
      %p105 = pneg %p99
      %p106 = scmp.eq.s32.totalorder %s20, 7
      %p107 = por %p105, %p106
      %p108 = scmp.ne.s32.totalorder %s100, %s103
      %p109 = scmp.eq.s32.totalorder %s20, 0
      %p110 = por %p108, %p109
      %p111 = scmp.ne.s32.totalorder %s100, %s103
      %p112 = scmp.eq.s32.totalorder %s25, 7
      %p113 = por %p111, %p112
      %p114 = scmp.ne.s32.totalorder %s103, %s104
      %p115 = scmp.eq.s32.totalorder %s25, 0
      %p116 = por %p114, %p115
      %p117 = scmp.ne.s32.totalorder %s103, %s104
      %p118 = scmp.eq.s32.totalorder %s26, 7
      %p119 = por %p117, %p118
      %p121 = scmp.ne.s32.totalorder %s104, %s120
      %p122 = scmp.eq.s32.totalorder %s26, 0
      %p123 = por %p121, %p122
      %s124 = ssub.s32 %s28, %s42
      %p125 = scmp.eq.s32.totalorder %s124, 0
      %s127 = sadd.s32 %s126, 1
      %s128 = scalar_select %p125, %s126, %s127
      %p131 = pneg %p125
      %p132 = scmp.eq.s32.totalorder %s20, 7
      %p133 = por %p131, %p132
      %p134 = scmp.ne.s32.totalorder %s126, %s129
      %p135 = scmp.eq.s32.totalorder %s20, 0
      %p136 = por %p134, %p135
      %p137 = scmp.ne.s32.totalorder %s126, %s129
      %p138 = scmp.eq.s32.totalorder %s25, 7
      %p139 = por %p137, %p138
      %p140 = scmp.ne.s32.totalorder %s129, %s130
      %p141 = scmp.eq.s32.totalorder %s25, 0
      %p142 = por %p140, %p141
      %p143 = scmp.ne.s32.totalorder %s129, %s130
      %p144 = scmp.eq.s32.totalorder %s26, 7
      %p145 = por %p143, %p144
      %p147 = scmp.ne.s32.totalorder %s130, %s146
      %p148 = scmp.eq.s32.totalorder %s26, 0
      %p149 = por %p147, %p148
      %s150 = ssub.s32 %s27, %s46
      %s151 = ssub.s32 %s28, %s42
      %s152 = sor.u32 %s150, %s151
      %p153 = scmp.eq.s32.totalorder %s152, 0
      %s155 = sadd.s32 %s154, 1
      %s156 = scalar_select %p153, %s154, %s155
      %p159 = pneg %p153
      %p160 = scmp.eq.s32.totalorder %s20, 7
      %p161 = por %p159, %p160
      %p162 = scmp.ne.s32.totalorder %s154, %s157
      %p163 = scmp.eq.s32.totalorder %s20, 0
      %p164 = por %p162, %p163
      %p165 = scmp.ne.s32.totalorder %s154, %s157
      %p166 = scmp.eq.s32.totalorder %s25, 7
      %p167 = por %p165, %p166
      %p168 = scmp.ne.s32.totalorder %s157, %s158
      %p169 = scmp.eq.s32.totalorder %s25, 0
      %p170 = por %p168, %p169
      %p171 = scmp.ne.s32.totalorder %s157, %s158
      %p172 = scmp.eq.s32.totalorder %s26, 7
      %p173 = por %p171, %p172
      %p175 = scmp.ne.s32.totalorder %s158, %s174
      %p176 = scmp.eq.s32.totalorder %s26, 0
      %p177 = por %p175, %p176
      %p178 = scmp.le.s32.totalorder 1, %s20
      %p179 = scmp.lt.s32.totalorder %s20, 9
      %p180 = pnand %p178, %p179
      %p181 = pneg %p180
      // Predicated region
      $region9: #{tpu_custom_call.1} parent=5 // pred_check
        _
      $region10: #{tpu_custom_call.1} parent=5 // pred_check_branch
        %183 = sbr.rel (%p180) target = $region12
      $region11: #{tpu_custom_call.1} parent=5 // pred_region
        %s184 = ssub.s32 %s20, 1
        // Predicated region
        $region13: #{tpu_custom_call.1} parent=11 // pred_check
          %p185 = pneg %p60
        $region14: #{tpu_custom_call.1} parent=11 // pred_check_branch
          %187 = sbr.rel (%p185) target = $region16
        $region15: #{tpu_custom_call.1} parent=11 // pred_region
          _
        $region16: #{tpu_custom_call.1} parent=11 // pred_fallthru
          _
      $region12: #{tpu_custom_call.1} parent=5 // pred_fallthru
        _
      %p188 = scmp.lt.s32.totalorder %s20, 8
      // Predicated region
      $region17: #{tpu_custom_call.1} parent=5 // pred_check
        %p189 = pneg %p188
      $region18: #{tpu_custom_call.1} parent=5 // pred_check_branch
        %191 = sbr.rel (%p189) target = $region20
      $region19: #{tpu_custom_call.1} parent=5 // pred_region
        // Predicated region
        $region21: #{tpu_custom_call.1} parent=19 // pred_check
          %p192 = pneg %p82
        $region22: #{tpu_custom_call.1} parent=19 // pred_check_branch
          %194 = sbr.rel (%p192) target = $region24
        $region23: #{tpu_custom_call.1} parent=19 // pred_region
          %s195 = sand.u32 %s72, 1
          %s196 = scalar_lea.sflag [#allocation5], %s195
          %s197 = sand.u32 %s72, 1
          %s198 = smul.addr %s197, 8
          %s199 = scalar_lea.vmem [#allocation4], %s198
          %s201 = ssub.s32 128, 128
          %202 = vsyncadd %s196, %s201
          %s203 = smul.addr %s27, 2
          %s204 = sadd.s32 %s29, %s203
          %s205 = smul.addr %s204, 128
          %s206 = scalar_lea.hbm %s1, %s205
          %s208 = sshll.u32 %s199, 4
          %s209 = int_to_ptr.vmem [resolvable:$true] %s208
          %211 = dma.hbm_to_vmem [thread:$0]  %s206, 128, %s209, %s196
        $region24: #{tpu_custom_call.1} parent=19 // pred_fallthru
          _
        // Predicated region
        $region25: #{tpu_custom_call.1} parent=19 // pred_check
          %p212 = pneg %p110
        $region26: #{tpu_custom_call.1} parent=19 // pred_check_branch
          %214 = sbr.rel (%p212) target = $region28
        $region27: #{tpu_custom_call.1} parent=19 // pred_region
          %s215 = sand.u32 %s100, 1
          %s216 = scalar_lea.sflag [#allocation8], %s215
          %s217 = sand.u32 %s100, 1
          %s218 = smul.addr %s217, 128
          %s219 = scalar_lea.vmem [#allocation7], %s218
          %s220 = smul.u32 16, %s29
          %s222 = ssub.s32 2048, 2048
          %223 = vsyncadd %s216, %s222
          %s224 = smul.addr %s220, 2
          %s225 = sadd.s32 %s28, %s224
          %s226 = smul.addr %s225, 128
          %s227 = scalar_lea.hbm %s2, %s226
          %s228 = sshll.u32 %s219, 4
          %s229 = int_to_ptr.vmem [resolvable:$true] %s228
          %234 = dma.hbm_to_vmem [thread:$0]  %s227, 2048, %s229, %s216, 256, 128, 8
        $region28: #{tpu_custom_call.1} parent=19 // pred_fallthru
          _
        // Predicated region
        $region29: #{tpu_custom_call.1} parent=19 // pred_check
          %p235 = pneg %p136
        $region30: #{tpu_custom_call.1} parent=19 // pred_check_branch
          %237 = sbr.rel (%p235) target = $region32
        $region31: #{tpu_custom_call.1} parent=19 // pred_region
          %p238 = scmp.lt.s32.totalorder %s28, 1
          %s239 = scalar_select %p238, %s28, 1
          %s240 = scalar_lea.vmem %s3, %s239
        $region32: #{tpu_custom_call.1} parent=19 // pred_fallthru
          _
      $region20: #{tpu_custom_call.1} parent=5 // pred_fallthru
        _
      %p241 = scmp.le.s32.totalorder 1, %s20
      %p242 = scmp.lt.s32.totalorder %s20, 9
      %p243 = pnand %p241, %p242
      %p244 = pneg %p243
      // Predicated region
      $region33: #{tpu_custom_call.1} parent=5 // pred_check
        _
      $region34: #{tpu_custom_call.1} parent=5 // pred_check_branch
        %246 = sbr.rel (%p243) target = $region36
      $region35: #{tpu_custom_call.1} parent=5 // pred_region
        %s247 = ssub.s32 %s20, 1
        %s248 = sand.u32 %s75, 1
        %s249 = scalar_lea.sflag [#allocation5], %s248
        %s250 = sand.u32 %s75, 1
        %s251 = smul.addr %s250, 8
        %s252 = scalar_lea.vmem [#allocation4], %s251
        // Predicated region
        $region37: #{tpu_custom_call.1} parent=35 // pred_check
          %p253 = pneg %p88
        $region38: #{tpu_custom_call.1} parent=35 // pred_check_branch
          %255 = sbr.rel (%p253) target = $region40
        $region39: #{tpu_custom_call.1} parent=35 // pred_region
          %256 = dma.done %s249, 128
        $region40: #{tpu_custom_call.1} parent=35 // pred_fallthru
          _
        %s257 = sand.u32 %s103, 1
        %s258 = scalar_lea.sflag [#allocation8], %s257
        %s259 = sand.u32 %s103, 1
        %s260 = smul.addr %s259, 128
        %s261 = scalar_lea.vmem [#allocation7], %s260
        // Predicated region
        $region41: #{tpu_custom_call.1} parent=35 // pred_check
          %p262 = pneg %p116
        $region42: #{tpu_custom_call.1} parent=35 // pred_check_branch
          %264 = sbr.rel (%p262) target = $region44
        $region43: #{tpu_custom_call.1} parent=35 // pred_region
          %265 = dma.done %s258, 2048
        $region44: #{tpu_custom_call.1} parent=35 // pred_fallthru
          _
        %p266 = pneg %p60
        %p267 = pneg %p57
        %s268 = sand.u32 %s75, 1
        %s269 = scalar_lea.sflag [#allocation5], %s268
        %s270 = sand.u32 %s75, 1
        %s271 = smul.addr %s270, 8
        %s272 = scalar_lea.vmem [#allocation4], %s271
        %p273 = pneg %p88
        %p274 = pneg %p85
        %s275 = sand.u32 %s103, 1
        %s276 = scalar_lea.sflag [#allocation8], %s275
        %s277 = sand.u32 %s103, 1
        %s278 = smul.addr %s277, 128
        %s279 = scalar_lea.vmem [#allocation7], %s278
        %p280 = pneg %p116
        %p281 = pneg %p113
        %p282 = scmp.lt.s32.totalorder %s31, 1
        %s283 = scalar_select %p282, %s31, 1
        %s284 = scalar_lea.vmem %s3, %s283
        %p285 = pneg %p142
        %p286 = pneg %p139
        %p287 = pneg %p170
        %p288 = pneg %p167
        %s289 = sand.u32 %s157, 1
        %s290 = scalar_lea.sflag [#allocation6], %s289
        %s291 = sand.u32 %s157, 1
        %s292 = smul.addr %s291, 8
        %s293 = scalar_lea.vmem [#allocation9], %s292
        %s294 = smul.u32 16, %s32
        %p295 = scmp.lt.s32.totalorder %s31, 1
        %s296 = scalar_select %p295, %s31, 1
        %s297 = scalar_lea.vmem %s3, %s296
        %p298 = scmp.eq.s32.totalorder %s32, 0
        // Predicated region
        $region45: #{tpu_custom_call.1} parent=35 // pred_check
          %p299 = pneg %p298
        $region46: #{tpu_custom_call.1} parent=35 // pred_check_branch
          %301 = sbr.rel (%p299) target = $region48
        $region47: #{tpu_custom_call.1} parent=35 // pred_region
          %302 = vst [vmem:[#allocation2] sm:$0xff] 0.0
        $region48: #{tpu_custom_call.1} parent=35 // pred_fallthru
          _
        %v303 = vld [vmem:[%s261] sm:$0xff]
        %v304 = vld [vmem:[%s261 + $0x8] sm:$0xff]
        %v305 = vld [vmem:[%s261 + $0x10] sm:$0xff]
        %v306 = vld [vmem:[%s261 + $0x18] sm:$0xff]
        %v307 = vld [vmem:[%s261 + $0x20] sm:$0xff]
        %v308 = vld [vmem:[%s261 + $0x28] sm:$0xff]
        %v309 = vld [vmem:[%s261 + $0x30] sm:$0xff]
        %v310 = vld [vmem:[%s261 + $0x38] sm:$0xff]
        %v311 = vld [vmem:[%s261 + $0x40] sm:$0xff]
        %v312 = vld [vmem:[%s261 + $0x48] sm:$0xff]
        %v313 = vld [vmem:[%s261 + $0x50] sm:$0xff]
        %v314 = vld [vmem:[%s261 + $0x58] sm:$0xff]
        %v315 = vld [vmem:[%s261 + $0x60] sm:$0xff]
        %v316 = vld [vmem:[%s261 + $0x68] sm:$0xff]
        %v317 = vld [vmem:[%s261 + $0x70] sm:$0xff]
        %v318 = vld [vmem:[%s261 + $0x78] sm:$0xff]
        %v319 = vld [vmem:[#allocation2] sm:$0xff]
        %v320 = vld [vmem:[%s252] sm:$0xff]
        %321 = vmatprep.subr.mxu0 0.0
        %322 = vmatpush1.msra.mxu0 %v303
        %323 = vmatprep.subr.mxu0 0.0
        %324 = vmatpush1.msra.mxu0 %v304
        %325 = vmatprep.subr.mxu0 0.0
        %326 = vmatpush1.msra.mxu0 %v305
        %327 = vmatprep.subr.mxu0 0.0
        %328 = vmatpush1.msra.mxu0 %v306
        %329 = vmatprep.subr.mxu0 0.0
        %330 = vmatpush1.msra.mxu0 %v307
        %331 = vmatprep.subr.mxu0 0.0
        %332 = vmatpush1.msra.mxu0 %v308
        %333 = vmatprep.subr.mxu0 0.0
        %334 = vmatpush1.msra.mxu0 %v309
        %335 = vmatprep.subr.mxu0 0.0
        %336 = vmatpush1.msra.mxu0 %v310
        %337 = vmatprep.subr.mxu0 0.0
        %338 = vmatpush1.msra.mxu0 %v311
        %339 = vmatprep.subr.mxu0 0.0
        %340 = vmatpush1.msra.mxu0 %v312
        %341 = vmatprep.subr.mxu0 0.0
        %342 = vmatpush1.msra.mxu0 %v313
        %343 = vmatprep.subr.mxu0 0.0
        %344 = vmatpush1.msra.mxu0 %v314
        %345 = vmatprep.subr.mxu0 0.0
        %346 = vmatpush1.msra.mxu0 %v315
        %347 = vmatprep.subr.mxu0 0.0
        %348 = vmatpush1.msra.mxu0 %v316
        %349 = vmatprep.subr.mxu0 0.0
        %350 = vmatpush1.msra.mxu0 %v317
        %351 = vmatprep.subr.mxu0 0.0
        %352 = vmatpush1.msra.mxu0 %v318
        %353 = vmatprep.subr.mxu0 0.0
        %354 = vmatpush1.msra.mxu0 0.0
        %355 = vmatprep.subr.mxu0 0.0
        %356 = vmatpush1.msra.mxu0 0.0
        %357 = vmatprep.subr.mxu0 0.0
        %358 = vmatpush1.msra.mxu0 0.0
        %359 = vmatprep.subr.mxu0 0.0
        %360 = vmatpush1.msra.mxu0 0.0
        %361 = vmatprep.subr.mxu0 0.0
        %362 = vmatpush1.msra.mxu0 0.0
        %363 = vmatprep.subr.mxu0 0.0
        %364 = vmatpush1.msra.mxu0 0.0
        %365 = vmatprep.subr.mxu0 0.0
        %366 = vmatpush1.msra.mxu0 0.0
        %367 = vmatprep.subr.mxu0 0.0
        %368 = vmatpush1.msra.mxu0 0.0
        %369 = vmatprep.subr.mxu0 0.0
        %370 = vmatpush1.msra.mxu0 0.0
        %371 = vmatprep.subr.mxu0 0.0
        %372 = vmatpush1.msra.mxu0 0.0
        %373 = vmatprep.subr.mxu0 0.0
        %374 = vmatpush1.msra.mxu0 0.0
        %375 = vmatprep.subr.mxu0 0.0
        %376 = vmatpush1.msra.mxu0 0.0
        %377 = vmatprep.subr.mxu0 0.0
        %378 = vmatpush1.msra.mxu0 0.0
        %379 = vmatprep.subr.mxu0 0.0
        %380 = vmatpush1.msra.mxu0 0.0
        %381 = vmatprep.subr.mxu0 0.0
        %382 = vmatpush1.msra.mxu0 0.0
        %383 = vmatprep.subr.mxu0 0.0
        %384 = vmatpush1.msra.mxu0 0.0
        %385 = vmatprep.mubr.f32.mxu0 0.0
        %386 = vmatmul.mubr.f32.gmra.mrb[0].mxu0 %v320
        %v387 = vpop.f32.mrb[0].mxu0
        %v388 = vadd.f32 0.0, %v387
        %v389 = vpop.f32.mrb[0].mxu0
        %390 = vdwg.mxu0
        %v391 = vadd.f32 %v319, %v388
        %392 = vst [vmem:[#allocation2] sm:$0xff] %v391
        %p393 = scmp.eq.s32.totalorder %s32, 1
        // Predicated region
        $region49: #{tpu_custom_call.1} parent=35 // pred_check
          %p394 = pneg %p393
        $region50: #{tpu_custom_call.1} parent=35 // pred_check_branch
          %396 = sbr.rel (%p394) target = $region52
        $region51: #{tpu_custom_call.1} parent=35 // pred_region
          %v397 = vld [vmem:[#allocation2] sm:$0xff]
          %v398 = vld [vmem:[%s297] sm:$0x1]
          %v400 = vlaneseq
          %v401 = vshrl.u32 %v400, 7
          %v402 = vsub.s32 0, %v401
          %v403 = vrot.slane %v398, %v402
          %v405 = vadd.f32 %v397, %v403
          %406 = vst [vmem:[%s293] sm:$0xff] %v405
        $region52: #{tpu_custom_call.1} parent=35 // pred_fallthru
          _
        %s407 = sand.u32 %s157, 1
        %s408 = scalar_lea.sflag [#allocation6], %s407
        %s409 = sand.u32 %s157, 1
        %s410 = smul.addr %s409, 8
        %s411 = scalar_lea.vmem [#allocation9], %s410
        // Predicated region
        $region53: #{tpu_custom_call.1} parent=35 // pred_check
          %p412 = pneg %p167
        $region54: #{tpu_custom_call.1} parent=35 // pred_check_branch
          %414 = sbr.rel (%p412) target = $region56
        $region55: #{tpu_custom_call.1} parent=35 // pred_region
          %s416 = ssub.s32 128, 128
          %417 = vsyncadd %s408, %s416
          %s418 = smul.addr %s30, 2
          %s419 = sadd.s32 %s31, %s418
          %s420 = smul.addr %s419, 128
          %s421 = scalar_lea.hbm %s4, %s420
          %s423 = sshll.u32 %s411, 4
          %s424 = int_to_ptr.vmem [resolvable:$true] %s423
          %426 = dma.vmem_to_hbm [thread:$0]  %s424, 128, %s421, %s408
        $region56: #{tpu_custom_call.1} parent=35 // pred_fallthru
          _
      $region36: #{tpu_custom_call.1} parent=5 // pred_fallthru
        _
      %p427 = scmp.le.s32.totalorder 2, %s20
      // Predicated region
      $region57: #{tpu_custom_call.1} parent=5 // pred_check
        %p428 = pneg %p427
      $region58: #{tpu_custom_call.1} parent=5 // pred_check_branch
        %430 = sbr.rel (%p428) target = $region60
      $region59: #{tpu_custom_call.1} parent=5 // pred_region
        %s431 = ssub.s32 %s20, 2
        // Predicated region
        $region61: #{tpu_custom_call.1} parent=59 // pred_check
          %p432 = pneg %p173
        $region62: #{tpu_custom_call.1} parent=59 // pred_check_branch
          %434 = sbr.rel (%p432) target = $region64
        $region63: #{tpu_custom_call.1} parent=59 // pred_region
          %s435 = sand.u32 %s158, 1
          %s436 = scalar_lea.sflag [#allocation6], %s435
          %s437 = sand.u32 %s158, 1
          %s438 = smul.addr %s437, 8
          %s439 = scalar_lea.vmem [#allocation9], %s438
          %440 = dma.done %s436, 128
        $region64: #{tpu_custom_call.1} parent=59 // pred_fallthru
          _
      $region60: #{tpu_custom_call.1} parent=5 // pred_fallthru
        _
    $region6: #{tpu_custom_call.1} parent=1 // loop_footer
      %s24 = sadd.s32 1, %s20
    $region7: #{tpu_custom_call.1} parent=1 // loop_footer_branch
      %19 = sbr.rel target = $region3
    $region8: #{tpu_custom_call.1} parent=1 // loop_exit
      _
    %441 = vsyncpa [#allocation5], 1
    %s442 = scalar_lea.sflag [#allocation5], 1
    %443 = vsyncpa %s442, 1
    %444 = vsyncpa [#allocation8], 1
    %s445 = scalar_lea.sflag [#allocation8], 1
    %446 = vsyncpa %s445, 1
    %447 = vsyncpa [#allocation6], 1
    %s448 = scalar_lea.sflag [#allocation6], 1
    %449 = vsyncpa %s448, 1

</llo_original>
